<compile_context>
chip_gen: v7x
topology: tpu7x:2x2x1
jax: 0.10.0
libtpu: 0.0.40
codegen_flags: <defaults>
</compile_context>

<pallas_src>
import jax
import jax.numpy as jnp
from jax.experimental import pallas as pl
from jax.experimental.pallas import tpu as pltpu


def rnn_kernel(x_ref, wih_ref, whh_ref, b_ref, wfc_ref, bfc_ref,
               out_ref, h_ref, xproj_ref):
    c = pl.program_id(0)
    bp, hp = h_ref.shape
    chunk = xproj_ref.shape[0] // bp

    @pl.when(c == 0)
    def _():
        h_ref[...] = jnp.zeros_like(h_ref)

    # Hoisted input projection (+bias) for the whole chunk: one MXU matmul,
    # (chunk*bp, ep) @ (ep, hp) -> (chunk*bp, hp), bias added once (not per timestep).
    xproj_ref[...] = (
        jnp.dot(x_ref[...], wih_ref[...], preferred_element_type=jnp.float32)
        + b_ref[...]
    )

    whh = whh_ref[...]  # loop-invariant, loaded once

    def step(t, h):
        off = pl.multiple_of(t * bp, bp)
        x_t = xproj_ref[pl.ds(off, bp), :]                       # (bp, hp) f32
        return jnp.tanh(
            x_t + jnp.dot(h.astype(whh.dtype), whh,
                          preferred_element_type=jnp.float32)
        )

    h = jax.lax.fori_loop(0, chunk, step, h_ref[...], unroll=(chunk <= 32))
    h_ref[...] = h  # carry hidden state to the next chunk (once per chunk, not per step)

    @pl.when(c == pl.num_programs(0) - 1)
    def _():
        out_ref[...] = (
            jnp.dot(h.astype(wfc_ref.dtype), wfc_ref[...],
                    preferred_element_type=jnp.float32)
            + bfc_ref[...]
        ).astype(out_ref.dtype)


def _round_up(x, m):
    return (x + m - 1) // m * m


def _pick_chunk(seq_len, target=256):
    if seq_len <= target:
        return seq_len
    for cand in range(target, 0, -1):
        if seq_len % cand == 0:
            return cand
    return seq_len


def rnn_forward(x_ids, emb_table, w_ih, w_hh, b_rnn, w_fc, b_fc,
                *, compute_dtype=jnp.float32):
    # x_ids: (seq_len, batch) int32 token ids (PyTorch nn.RNN is seq-first).
    seq_len, batch = x_ids.shape
    emb_dim = emb_table.shape[1]
    hidden_dim = w_hh.shape[0]
    output_dim = w_fc.shape[0]

    # Hardware-aligned padded sizes.
    bp = _round_up(batch, 8)
    ep = _round_up(emb_dim, 128)
    hp = _round_up(hidden_dim, 128)
    op = _round_up(output_dim, 128)

    # Embedding lookup as plain XLA gather in the wrapper (glue).
    # TODO(synk): fuse the gather into the kernel via scalar-prefetched token ids + DMA.
    embedded = emb_table[x_ids].astype(compute_dtype)           # (seq, batch, emb)
    embedded = jnp.pad(embedded, ((0, 0), (0, bp - batch), (0, ep - emb_dim)))
    emb2d = embedded.reshape(seq_len * bp, ep)                  # time-major rows

    # Pre-transposed, zero-padded weights: (in, out) layout, no .T inside the kernel.
    wih_t = jnp.pad(w_ih.T, ((0, ep - emb_dim), (0, hp - hidden_dim))).astype(compute_dtype)
    whh_t = jnp.pad(w_hh.T, ((0, hp - hidden_dim), (0, hp - hidden_dim))).astype(compute_dtype)
    wfc_t = jnp.pad(w_fc.T, ((0, hp - hidden_dim), (0, op - output_dim))).astype(compute_dtype)
    b2 = jnp.pad(b_rnn.reshape(1, -1), ((0, 0), (0, hp - hidden_dim))).astype(jnp.float32)
    bfc2 = jnp.pad(b_fc.reshape(1, -1), ((0, 0), (0, op - output_dim))).astype(jnp.float32)

    chunk = _pick_chunk(seq_len)
    num_chunks = seq_len // chunk

    grid_spec = pltpu.PrefetchScalarGridSpec(
        num_scalar_prefetch=0,
        grid=(num_chunks,),
        in_specs=[
            pl.BlockSpec((chunk * bp, ep), lambda c: (c, 0)),   # embedded rows for chunk c
            pl.BlockSpec((ep, hp), lambda c: (0, 0)),           # W_ih^T (resident)
            pl.BlockSpec((hp, hp), lambda c: (0, 0)),           # W_hh^T (resident)
            pl.BlockSpec((1, hp), lambda c: (0, 0)),            # b_ih + b_hh
            pl.BlockSpec((hp, op), lambda c: (0, 0)),           # W_fc^T (resident)
            pl.BlockSpec((1, op), lambda c: (0, 0)),            # b_fc
        ],
        out_specs=pl.BlockSpec((bp, op), lambda c: (0, 0)),     # lane-dense 128-wide output
        scratch_shapes=[
            pltpu.VMEM((bp, hp), jnp.float32),                  # hidden state across chunks
            pltpu.VMEM((chunk * bp, hp), jnp.float32),          # hoisted input projection
        ],
    )

    out_padded = pl.pallas_call(
        rnn_kernel,
        out_shape=jax.ShapeDtypeStruct((bp, op), jnp.float32),
        grid_spec=grid_spec,
        compiler_params=pltpu.CompilerParams(
            dimension_semantics=("arbitrary",),  # chunks are sequential (h carried)
        ),
    )(emb2d, wih_t, whh_t, b2, wfc_t, bfc2)

    return out_padded[:batch, :output_dim]


def rnn_reference(x_ids, emb_table, w_ih, w_hh, b_rnn, w_fc, b_fc):
    embedded = emb_table[x_ids]  # (seq, batch, emb)
    batch = embedded.shape[1]
    hidden_dim = w_hh.shape[0]
    h = jnp.zeros((batch, hidden_dim), jnp.float32)

    def step(h, x_t):
        h_new = jnp.tanh(x_t @ w_ih.T + h @ w_hh.T + b_rnn)
        return h_new, None

    h_final, _ = jax.lax.scan(step, h, embedded)
    return h_final @ w_fc.T + b_fc


if __name__ == "__main__":
    # Small deterministic config.
    vocab_size = 50
    embedding_dim = 32
    hidden_dim = 32
    output_dim = 4
    seq_len = 8
    batch = 2

    key = jax.random.PRNGKey(0)
    k_ids, k_emb, k_ih, k_hh, k_bih, k_bhh, k_wfc, k_bfc = jax.random.split(key, 8)

    # Token ids [seq, batch]
    x_ids = jax.random.randint(k_ids, (seq_len, batch), 0, vocab_size, dtype=jnp.int32)

    # Parameters (PyTorch-like uniform init bounds, deterministic).
    emb_table = jax.random.normal(k_emb, (vocab_size, embedding_dim), jnp.float32)
    bound_rnn = 1.0 / jnp.sqrt(hidden_dim)
    w_ih = jax.random.uniform(k_ih, (hidden_dim, embedding_dim), jnp.float32, -bound_rnn, bound_rnn)
    w_hh = jax.random.uniform(k_hh, (hidden_dim, hidden_dim), jnp.float32, -bound_rnn, bound_rnn)
    b_ih = jax.random.uniform(k_bih, (hidden_dim,), jnp.float32, -bound_rnn, bound_rnn)
    b_hh = jax.random.uniform(k_bhh, (hidden_dim,), jnp.float32, -bound_rnn, bound_rnn)
    b_rnn = b_ih + b_hh
    bound_fc = 1.0 / jnp.sqrt(hidden_dim)
    w_fc = jax.random.uniform(k_wfc, (output_dim, hidden_dim), jnp.float32, -bound_fc, bound_fc)
    b_fc = jax.random.uniform(k_bfc, (output_dim,), jnp.float32, -bound_fc, bound_fc)

    out = rnn_forward(x_ids, emb_table, w_ih, w_hh, b_rnn, w_fc, b_fc)
    out = jax.block_until_ready(out)

    ref = rnn_reference(x_ids, emb_table, w_ih, w_hh, b_rnn, w_fc, b_fc)
    assert out.shape == (batch, output_dim)
    assert jnp.allclose(out, ref, atol=1e-5, rtol=1e-5), (out, ref)

    print("KERNEL_OK")
</pallas_src>

<mosaic_0001>
module attributes {stable_mosaic.version = 11 : i64} {
  func.func @rnn_kernel(%arg0: i32, %arg1: memref<64x128xf32, #tpu.memory_space<vmem>>, %arg2: memref<128x128xf32, #tpu.memory_space<vmem>>, %arg3: memref<128x128xf32, #tpu.memory_space<vmem>>, %arg4: memref<1x128xf32, #tpu.memory_space<vmem>>, %arg5: memref<128x128xf32, #tpu.memory_space<vmem>>, %arg6: memref<1x128xf32, #tpu.memory_space<vmem>>, %arg7: memref<8x128xf32, #tpu.memory_space<vmem>>, %arg8: memref<8x128xf32, #tpu.memory_space<vmem>>, %arg9: memref<64x128xf32, #tpu.memory_space<vmem>>) attributes {dimension_semantics = [#tpu.dimension_semantics<arbitrary>], iteration_bounds = array<i64: 1>, scalar_prefetch = 0 : i64, scratch_operands = 2 : i64, tpu.core_type = #tpu.core_type<tc>, window_params = [{transform_indices = @transform_0, window_bounds = array<i64: 64, 128>}, {pipeline_mode = #tpu.pipeline_mode<synchronous>, transform_indices = @transform_1, window_bounds = array<i64: 128, 128>}, {pipeline_mode = #tpu.pipeline_mode<synchronous>, transform_indices = @transform_2, window_bounds = array<i64: 128, 128>}, {pipeline_mode = #tpu.pipeline_mode<synchronous>, transform_indices = @transform_3, window_bounds = array<i64: 1, 128>}, {pipeline_mode = #tpu.pipeline_mode<synchronous>, transform_indices = @transform_4, window_bounds = array<i64: 128, 128>}, {pipeline_mode = #tpu.pipeline_mode<synchronous>, transform_indices = @transform_5, window_bounds = array<i64: 1, 128>}, {pipeline_mode = #tpu.pipeline_mode<synchronous>, transform_indices = @transform_6, window_bounds = array<i64: 8, 128>}]} {
    %c0_i32 = arith.constant 0 : i32
    %0 = arith.cmpi eq, %arg0, %c0_i32 : i32
    %1 = arith.extui %0 : i1 to i32
    %c0_i32_0 = arith.constant 0 : i32
    %2 = arith.cmpi ne, %1, %c0_i32_0 : i32
    scf.if %2 {
      %cst_41 = arith.constant 0.000000e+00 : f32
      %72 = vector.broadcast %cst_41 : f32 to vector<8x128xf32>
      %c0_42 = arith.constant 0 : index
      %c0_43 = arith.constant 0 : index
      %73 = vector.load %arg8[%c0_42, %c0_43] : memref<8x128xf32, #tpu.memory_space<vmem>>, vector<8x128xf32>
      tpu.vector_store %arg8[%c0_42, %c0_43], %72 {strides = array<i32>} : memref<8x128xf32, #tpu.memory_space<vmem>>, vector<8x128xf32>,
    } else {
    }
    %c0 = arith.constant 0 : index
    %c0_1 = arith.constant 0 : index
    %3 = vector.load %arg1[%c0, %c0_1] : memref<64x128xf32, #tpu.memory_space<vmem>>, vector<64x128xf32>
    %c0_2 = arith.constant 0 : index
    %c0_3 = arith.constant 0 : index
    %4 = vector.load %arg2[%c0_2, %c0_3] : memref<128x128xf32, #tpu.memory_space<vmem>>, vector<128x128xf32>
    %cst = arith.constant dense<0.000000e+00> : vector<64x128xf32>
    %5 = tpu.matmul %3, %4, %cst {dimension_numbers = #tpu.dot_dimension_numbers<[1], [0], [0], [1], [0, 0, 1, 1], [], []>} : vector<64x128xf32>, vector<128x128xf32>, vector<64x128xf32> -> vector<64x128xf32>
    %c0_4 = arith.constant 0 : index
    %c0_5 = arith.constant 0 : index
    %6 = vector.load %arg4[%c0_4, %c0_5] : memref<1x128xf32, #tpu.memory_space<vmem>>, vector<1x128xf32>
    %7 = vector.broadcast %6 : vector<1x128xf32> to vector<64x128xf32>
    %8 = arith.addf %5, %7 : vector<64x128xf32>
    %c0_6 = arith.constant 0 : index
    %c0_7 = arith.constant 0 : index
    %9 = vector.load %arg9[%c0_6, %c0_7] : memref<64x128xf32, #tpu.memory_space<vmem>>, vector<64x128xf32>
    tpu.vector_store %arg9[%c0_6, %c0_7], %8 {strides = array<i32>} : memref<64x128xf32, #tpu.memory_space<vmem>>, vector<64x128xf32>,
    %c0_8 = arith.constant 0 : index
    %c0_9 = arith.constant 0 : index
    %10 = vector.load %arg3[%c0_8, %c0_9] : memref<128x128xf32, #tpu.memory_space<vmem>>, vector<128x128xf32>
    %c0_10 = arith.constant 0 : index
    %c0_11 = arith.constant 0 : index
    %11 = vector.load %arg8[%c0_10, %c0_11] : memref<8x128xf32, #tpu.memory_space<vmem>>, vector<8x128xf32>
    %c0_i32_12 = arith.constant 0 : i32
    %c8_i32 = arith.constant 8 : i32
    %12 = arith.muli %c0_i32_12, %c8_i32 : i32
    %13 = tpu.assume_multiple %12, 8 : i32
    %14 = arith.index_cast %13 : i32 to index
    %c0_13 = arith.constant 0 : index
    %15 = vector.load %arg9[%14, %c0_13] : memref<64x128xf32, #tpu.memory_space<vmem>>, vector<8x128xf32>
    %cst_14 = arith.constant dense<0.000000e+00> : vector<8x128xf32>
    %16 = tpu.matmul %11, %10, %cst_14 {dimension_numbers = #tpu.dot_dimension_numbers<[1], [0], [0], [1], [0, 0, 1, 1], [], []>} : vector<8x128xf32>, vector<128x128xf32>, vector<8x128xf32> -> vector<8x128xf32>
    %17 = arith.addf %15, %16 : vector<8x128xf32>
    %18 = math.tanh %17 : vector<8x128xf32>
    %c1_i32 = arith.constant 1 : i32
    %c8_i32_15 = arith.constant 8 : i32
    %19 = arith.muli %c1_i32, %c8_i32_15 : i32
    %20 = tpu.assume_multiple %19, 8 : i32
    %21 = arith.index_cast %20 : i32 to index
    %c0_16 = arith.constant 0 : index
    %22 = vector.load %arg9[%21, %c0_16] : memref<64x128xf32, #tpu.memory_space<vmem>>, vector<8x128xf32>
    %cst_17 = arith.constant dense<0.000000e+00> : vector<8x128xf32>
    %23 = tpu.matmul %18, %10, %cst_17 {dimension_numbers = #tpu.dot_dimension_numbers<[1], [0], [0], [1], [0, 0, 1, 1], [], []>} : vector<8x128xf32>, vector<128x128xf32>, vector<8x128xf32> -> vector<8x128xf32>
    %24 = arith.addf %22, %23 : vector<8x128xf32>
    %25 = math.tanh %24 : vector<8x128xf32>
    %c2_i32 = arith.constant 2 : i32
    %c8_i32_18 = arith.constant 8 : i32
    %26 = arith.muli %c2_i32, %c8_i32_18 : i32
    %27 = tpu.assume_multiple %26, 8 : i32
    %28 = arith.index_cast %27 : i32 to index
    %c0_19 = arith.constant 0 : index
    %29 = vector.load %arg9[%28, %c0_19] : memref<64x128xf32, #tpu.memory_space<vmem>>, vector<8x128xf32>
    %cst_20 = arith.constant dense<0.000000e+00> : vector<8x128xf32>
    %30 = tpu.matmul %25, %10, %cst_20 {dimension_numbers = #tpu.dot_dimension_numbers<[1], [0], [0], [1], [0, 0, 1, 1], [], []>} : vector<8x128xf32>, vector<128x128xf32>, vector<8x128xf32> -> vector<8x128xf32>
    %31 = arith.addf %29, %30 : vector<8x128xf32>
    %32 = math.tanh %31 : vector<8x128xf32>
    %c3_i32 = arith.constant 3 : i32
    %c8_i32_21 = arith.constant 8 : i32
    %33 = arith.muli %c3_i32, %c8_i32_21 : i32
    %34 = tpu.assume_multiple %33, 8 : i32
    %35 = arith.index_cast %34 : i32 to index
    %c0_22 = arith.constant 0 : index
    %36 = vector.load %arg9[%35, %c0_22] : memref<64x128xf32, #tpu.memory_space<vmem>>, vector<8x128xf32>
    %cst_23 = arith.constant dense<0.000000e+00> : vector<8x128xf32>
    %37 = tpu.matmul %32, %10, %cst_23 {dimension_numbers = #tpu.dot_dimension_numbers<[1], [0], [0], [1], [0, 0, 1, 1], [], []>} : vector<8x128xf32>, vector<128x128xf32>, vector<8x128xf32> -> vector<8x128xf32>
    %38 = arith.addf %36, %37 : vector<8x128xf32>
    %39 = math.tanh %38 : vector<8x128xf32>
    %c4_i32 = arith.constant 4 : i32
    %c8_i32_24 = arith.constant 8 : i32
    %40 = arith.muli %c4_i32, %c8_i32_24 : i32
    %41 = tpu.assume_multiple %40, 8 : i32
    %42 = arith.index_cast %41 : i32 to index
    %c0_25 = arith.constant 0 : index
    %43 = vector.load %arg9[%42, %c0_25] : memref<64x128xf32, #tpu.memory_space<vmem>>, vector<8x128xf32>
    %cst_26 = arith.constant dense<0.000000e+00> : vector<8x128xf32>
    %44 = tpu.matmul %39, %10, %cst_26 {dimension_numbers = #tpu.dot_dimension_numbers<[1], [0], [0], [1], [0, 0, 1, 1], [], []>} : vector<8x128xf32>, vector<128x128xf32>, vector<8x128xf32> -> vector<8x128xf32>
    %45 = arith.addf %43, %44 : vector<8x128xf32>
    %46 = math.tanh %45 : vector<8x128xf32>
    %c5_i32 = arith.constant 5 : i32
    %c8_i32_27 = arith.constant 8 : i32
    %47 = arith.muli %c5_i32, %c8_i32_27 : i32
    %48 = tpu.assume_multiple %47, 8 : i32
    %49 = arith.index_cast %48 : i32 to index
    %c0_28 = arith.constant 0 : index
    %50 = vector.load %arg9[%49, %c0_28] : memref<64x128xf32, #tpu.memory_space<vmem>>, vector<8x128xf32>
    %cst_29 = arith.constant dense<0.000000e+00> : vector<8x128xf32>
    %51 = tpu.matmul %46, %10, %cst_29 {dimension_numbers = #tpu.dot_dimension_numbers<[1], [0], [0], [1], [0, 0, 1, 1], [], []>} : vector<8x128xf32>, vector<128x128xf32>, vector<8x128xf32> -> vector<8x128xf32>
    %52 = arith.addf %50, %51 : vector<8x128xf32>
    %53 = math.tanh %52 : vector<8x128xf32>
    %c6_i32 = arith.constant 6 : i32
    %c8_i32_30 = arith.constant 8 : i32
    %54 = arith.muli %c6_i32, %c8_i32_30 : i32
    %55 = tpu.assume_multiple %54, 8 : i32
    %56 = arith.index_cast %55 : i32 to index
    %c0_31 = arith.constant 0 : index
    %57 = vector.load %arg9[%56, %c0_31] : memref<64x128xf32, #tpu.memory_space<vmem>>, vector<8x128xf32>
    %cst_32 = arith.constant dense<0.000000e+00> : vector<8x128xf32>
    %58 = tpu.matmul %53, %10, %cst_32 {dimension_numbers = #tpu.dot_dimension_numbers<[1], [0], [0], [1], [0, 0, 1, 1], [], []>} : vector<8x128xf32>, vector<128x128xf32>, vector<8x128xf32> -> vector<8x128xf32>
    %59 = arith.addf %57, %58 : vector<8x128xf32>
    %60 = math.tanh %59 : vector<8x128xf32>
    %c7_i32 = arith.constant 7 : i32
    %c8_i32_33 = arith.constant 8 : i32
    %61 = arith.muli %c7_i32, %c8_i32_33 : i32
    %62 = tpu.assume_multiple %61, 8 : i32
    %63 = arith.index_cast %62 : i32 to index
    %c0_34 = arith.constant 0 : index
    %64 = vector.load %arg9[%63, %c0_34] : memref<64x128xf32, #tpu.memory_space<vmem>>, vector<8x128xf32>
    %cst_35 = arith.constant dense<0.000000e+00> : vector<8x128xf32>
    %65 = tpu.matmul %60, %10, %cst_35 {dimension_numbers = #tpu.dot_dimension_numbers<[1], [0], [0], [1], [0, 0, 1, 1], [], []>} : vector<8x128xf32>, vector<128x128xf32>, vector<8x128xf32> -> vector<8x128xf32>
    %66 = arith.addf %64, %65 : vector<8x128xf32>
    %67 = math.tanh %66 : vector<8x128xf32>
    %c8_i32_36 = arith.constant 8 : i32
    %c0_37 = arith.constant 0 : index
    %c0_38 = arith.constant 0 : index
    %68 = vector.load %arg8[%c0_37, %c0_38] : memref<8x128xf32, #tpu.memory_space<vmem>>, vector<8x128xf32>
    tpu.vector_store %arg8[%c0_37, %c0_38], %67 {strides = array<i32>} : memref<8x128xf32, #tpu.memory_space<vmem>>, vector<8x128xf32>,
    %c0_i32_39 = arith.constant 0 : i32
    %69 = arith.cmpi eq, %arg0, %c0_i32_39 : i32
    %70 = arith.extui %69 : i1 to i32
    %c0_i32_40 = arith.constant 0 : i32
    %71 = arith.cmpi ne, %70, %c0_i32_40 : i32
    scf.if %71 {
      %c0_41 = arith.constant 0 : index
      %c0_42 = arith.constant 0 : index
      %72 = vector.load %arg5[%c0_41, %c0_42] : memref<128x128xf32, #tpu.memory_space<vmem>>, vector<128x128xf32>
      %cst_43 = arith.constant dense<0.000000e+00> : vector<8x128xf32>
      %73 = tpu.matmul %67, %72, %cst_43 {dimension_numbers = #tpu.dot_dimension_numbers<[1], [0], [0], [1], [0, 0, 1, 1], [], []>} : vector<8x128xf32>, vector<128x128xf32>, vector<8x128xf32> -> vector<8x128xf32>
      %c0_44 = arith.constant 0 : index
      %c0_45 = arith.constant 0 : index
      %74 = vector.load %arg6[%c0_44, %c0_45] : memref<1x128xf32, #tpu.memory_space<vmem>>, vector<1x128xf32>
      %75 = vector.broadcast %74 : vector<1x128xf32> to vector<8x128xf32>
      %76 = arith.addf %73, %75 : vector<8x128xf32>
      %c0_46 = arith.constant 0 : index
      %c0_47 = arith.constant 0 : index
      %77 = vector.load %arg7[%c0_46, %c0_47] : memref<8x128xf32, #tpu.memory_space<vmem>>, vector<8x128xf32>
      tpu.vector_store %arg7[%c0_46, %c0_47], %76 {strides = array<i32>} : memref<8x128xf32, #tpu.memory_space<vmem>>, vector<8x128xf32>,
    } else {
    }
    return
  }
  func.func @transform_0(%arg0: i32) -> (i32, i32) {
    %c0_i32 = arith.constant 0 : i32
    %c0_i32_0 = arith.constant 0 : i32
    return %arg0, %c0_i32 : i32, i32
  }
  func.func @transform_1(%arg0: i32) -> (i32, i32) {
    %c0_i32 = arith.constant 0 : i32
    %c0_i32_0 = arith.constant 0 : i32
    %c0_i32_1 = arith.constant 0 : i32
    return %c0_i32, %c0_i32_0 : i32, i32
  }
  func.func @transform_2(%arg0: i32) -> (i32, i32) {
    %c0_i32 = arith.constant 0 : i32
    %c0_i32_0 = arith.constant 0 : i32
    %c0_i32_1 = arith.constant 0 : i32
    return %c0_i32, %c0_i32_0 : i32, i32
  }
  func.func @transform_3(%arg0: i32) -> (i32, i32) {
    %c0_i32 = arith.constant 0 : i32
    %c0_i32_0 = arith.constant 0 : i32
    %c0_i32_1 = arith.constant 0 : i32
    return %c0_i32, %c0_i32_0 : i32, i32
  }
  func.func @transform_4(%arg0: i32) -> (i32, i32) {
    %c0_i32 = arith.constant 0 : i32
    %c0_i32_0 = arith.constant 0 : i32
    %c0_i32_1 = arith.constant 0 : i32
    return %c0_i32, %c0_i32_0 : i32, i32
  }
  func.func @transform_5(%arg0: i32) -> (i32, i32) {
    %c0_i32 = arith.constant 0 : i32
    %c0_i32_0 = arith.constant 0 : i32
    %c0_i32_1 = arith.constant 0 : i32
    return %c0_i32, %c0_i32_0 : i32, i32
  }
  func.func @transform_6(%arg0: i32) -> (i32, i32) {
    %c0_i32 = arith.constant 0 : i32
    %c0_i32_0 = arith.constant 0 : i32
    %c0_i32_1 = arith.constant 0 : i32
    return %c0_i32, %c0_i32_0 : i32, i32
  }
}

</mosaic_0001>

<llo_original>
// kernel: tpu_custom_call.1
$region0: #{tpu_custom_call.1}
  #allocation0 [shape = 'u32[]', space=smem, size = 0x4, offset = 0x4, fixed_abs, tag = 'smem constant byte address 0x4 - core index']
  #allocation1 [shape = 'u32[144,128]{1,0:T(1,128)}', space=vmem, size = 0x12000, scoped, tag = 'internal scratch']
  #allocation2 [shape = 'f32[8,128]{1,0:T(8,128)}', space=vmem, size = 0x1000, scoped, tag = 'scratch operand']
  #allocation3 [shape = 'f32[64,128]{1,0:T(8,128)}', space=vmem, size = 0x8000, scoped, tag = 'scratch operand']
  %s0 = inlined_call_operand.hbm [shape: f32[64,128], index: 0, kind: input, shape index: {}]
  %s1 = inlined_call_operand.hbm [shape: f32[128,128], index: 1, kind: input, shape index: {}]
  %s2 = inlined_call_operand.hbm [shape: f32[128,128], index: 2, kind: input, shape index: {}]
  %s3 = inlined_call_operand.vmem [shape: f32[1,128], index: 3, kind: input, shape index: {}]
  %s4 = inlined_call_operand.hbm [shape: f32[128,128], index: 4, kind: input, shape index: {}]
  %s5 = inlined_call_operand.vmem [shape: f32[1,128], index: 5, kind: input, shape index: {}]
  %s6 = inlined_call_operand.hbm [shape: f32[8,128], index: 6, kind: output, shape index: {}]
  %s7 = sld [smem:[#allocation0]]
  $region58: #{tpu_custom_call.1} parent=0
    _
  %s9 = ssub.s32 1, %s7
  %s10 = scalar_select 0, %s9, %s7
  $region1: #{tpu_custom_call.1} parent=0
    #allocation4 [shape = 'u8[32768]{0}', space=vmem, size = 0x8000, scoped, tag = 'input window, operand 0, single buffered']
    #allocation5 [shape = 's32[1]{0}', space=sflag, size = 0x4, scoped, tag = 'scoped memory for tpu_custom_call.1']
    #allocation6 [shape = 's32[1]{0}', space=sflag, size = 0x4, scoped, tag = 'scoped memory for tpu_custom_call.1']
    #allocation7 [shape = 'u8[65536]{0}', space=vmem, size = 0x10000, scoped, tag = 'input window, operand 1, single buffered']
    #allocation8 [shape = 's32[1]{0}', space=sflag, size = 0x4, scoped, tag = 'scoped memory for tpu_custom_call.1']
    #allocation9 [shape = 'u8[65536]{0}', space=vmem, size = 0x10000, scoped, tag = 'input window, operand 2, single buffered']
    #allocation10 [shape = 'u8[65536]{0}', space=vmem, size = 0x10000, scoped, tag = 'input window, operand 4, single buffered']
    #allocation11 [shape = 's32[1]{0}', space=sflag, size = 0x4, scoped, tag = 'scoped memory for tpu_custom_call.1']
    #allocation12 [shape = 'u8[4096]{0}', space=vmem, size = 0x1000, scoped, tag = 'output window, operand 0, single buffered']
    %11 = vsyncpa [#allocation5], 0
    %12 = vsyncpa [#allocation8], 0
    %13 = vsyncpa [#allocation11], 0
    %14 = vsyncpa [#allocation6], 0
    // Predicated region
    $region2: #{tpu_custom_call.1} parent=1 // pred_check
      _
    $region3: #{tpu_custom_call.1} parent=1 // pred_check_branch
      %16 = sbr.rel (0) target = $region5
    $region4: #{tpu_custom_call.1} parent=1 // pred_region
      %s18 = ssub.s32 1024, 1024
      %19 = vsyncadd [#allocation5], %s18
      %s20 = sshll.u32 [#allocation4], 4
      %s21 = int_to_ptr.vmem [resolvable:$true] %s20
      %26 = dma.hbm_to_vmem [thread:$0]  %s0, 1024, %s21, [#allocation5], 128, 128, 8
    $region5: #{tpu_custom_call.1} parent=1 // pred_fallthru
      _
    // Predicated region
    $region6: #{tpu_custom_call.1} parent=1 // pred_check
      _
    $region7: #{tpu_custom_call.1} parent=1 // pred_check_branch
      %28 = sbr.rel (0) target = $region9
    $region8: #{tpu_custom_call.1} parent=1 // pred_region
      %s30 = ssub.s32 2048, 2048
      %31 = vsyncadd [#allocation8], %s30
      %s32 = sshll.u32 [#allocation7], 4
      %s33 = int_to_ptr.vmem [resolvable:$true] %s32
      %38 = dma.hbm_to_vmem [thread:$0]  %s1, 2048, %s33, [#allocation8], 128, 128, 8
    $region9: #{tpu_custom_call.1} parent=1 // pred_fallthru
      _
    // Predicated region
    $region10: #{tpu_custom_call.1} parent=1 // pred_check
      _
    $region11: #{tpu_custom_call.1} parent=1 // pred_check_branch
      %40 = sbr.rel (0) target = $region13
    $region12: #{tpu_custom_call.1} parent=1 // pred_region
      %s42 = ssub.s32 2048, 2048
      %43 = vsyncadd [#allocation8], %s42
      %s44 = sshll.u32 [#allocation9], 4
      %s45 = int_to_ptr.vmem [resolvable:$true] %s44
      %50 = dma.hbm_to_vmem [thread:$0]  %s2, 2048, %s45, [#allocation8], 128, 128, 8
    $region13: #{tpu_custom_call.1} parent=1 // pred_fallthru
      _
    // Predicated region
    $region14: #{tpu_custom_call.1} parent=1 // pred_check
      _
    $region15: #{tpu_custom_call.1} parent=1 // pred_check_branch
      %52 = sbr.rel (0) target = $region17
    $region16: #{tpu_custom_call.1} parent=1 // pred_region
      _
    $region17: #{tpu_custom_call.1} parent=1 // pred_fallthru
      _
    // Predicated region
    $region18: #{tpu_custom_call.1} parent=1 // pred_check
      _
    $region19: #{tpu_custom_call.1} parent=1 // pred_check_branch
      %54 = sbr.rel (0) target = $region21
    $region20: #{tpu_custom_call.1} parent=1 // pred_region
      %s56 = ssub.s32 2048, 2048
      %57 = vsyncadd [#allocation11], %s56
      %s58 = sshll.u32 [#allocation10], 4
      %s59 = int_to_ptr.vmem [resolvable:$true] %s58
      %64 = dma.hbm_to_vmem [thread:$0]  %s4, 2048, %s59, [#allocation11], 128, 128, 8
    $region21: #{tpu_custom_call.1} parent=1 // pred_fallthru
      _
    // Predicated region
    $region22: #{tpu_custom_call.1} parent=1 // pred_check
      _
    $region23: #{tpu_custom_call.1} parent=1 // pred_check_branch
      %66 = sbr.rel (0) target = $region25
    $region24: #{tpu_custom_call.1} parent=1 // pred_region
      _
    $region25: #{tpu_custom_call.1} parent=1 // pred_fallthru
      _
    // Predicated region
    $region26: #{tpu_custom_call.1} parent=1 // pred_check
      _
    $region27: #{tpu_custom_call.1} parent=1 // pred_check_branch
      %68 = sbr.rel (0) target = $region29
    $region28: #{tpu_custom_call.1} parent=1 // pred_region
      %69 = dma.done [#allocation5], 1024
    $region29: #{tpu_custom_call.1} parent=1 // pred_fallthru
      _
    // Predicated region
    $region30: #{tpu_custom_call.1} parent=1 // pred_check
      _
    $region31: #{tpu_custom_call.1} parent=1 // pred_check_branch
      %71 = sbr.rel (0) target = $region33
    $region32: #{tpu_custom_call.1} parent=1 // pred_region
      %72 = dma.done [#allocation8], 2048
    $region33: #{tpu_custom_call.1} parent=1 // pred_fallthru
      _
    // Predicated region
    $region34: #{tpu_custom_call.1} parent=1 // pred_check
      _
    $region35: #{tpu_custom_call.1} parent=1 // pred_check_branch
      %74 = sbr.rel (0) target = $region37
    $region36: #{tpu_custom_call.1} parent=1 // pred_region
      %75 = dma.done [#allocation8], 2048
    $region37: #{tpu_custom_call.1} parent=1 // pred_fallthru
      _
    // Predicated region
    $region38: #{tpu_custom_call.1} parent=1 // pred_check
      _
    $region39: #{tpu_custom_call.1} parent=1 // pred_check_branch
      %77 = sbr.rel (0) target = $region41
    $region40: #{tpu_custom_call.1} parent=1 // pred_region
      %78 = dma.done [#allocation11], 2048
    $region41: #{tpu_custom_call.1} parent=1 // pred_fallthru
      _
    %p79 = scmp.eq.s32.totalorder 0, 0
    // Predicated region
    $region42: #{tpu_custom_call.1} parent=1 // pred_check
      %p80 = pneg %p79
    $region43: #{tpu_custom_call.1} parent=1 // pred_check_branch
      %82 = sbr.rel (%p80) target = $region45
    $region44: #{tpu_custom_call.1} parent=1 // pred_region
      %83 = vst [vmem:[#allocation2] sm:$0xff] 0.0
    $region45: #{tpu_custom_call.1} parent=1 // pred_fallthru
      _
    %v84 = vld [vmem:[#allocation4] sm:$0xff]
    %v85 = vld [vmem:[#allocation4 + $0x8] sm:$0xff]
    %v86 = vld [vmem:[#allocation4 + $0x10] sm:$0xff]
    %v87 = vld [vmem:[#allocation4 + $0x18] sm:$0xff]
    %v88 = vld [vmem:[#allocation4 + $0x20] sm:$0xff]
    %v89 = vld [vmem:[#allocation4 + $0x28] sm:$0xff]
    %v90 = vld [vmem:[#allocation4 + $0x30] sm:$0xff]
    %v91 = vld [vmem:[#allocation4 + $0x38] sm:$0xff]
    %v92 = vld [vmem:[#allocation7] sm:$0xff]
    %v93 = vld [vmem:[#allocation7 + $0x8] sm:$0xff]
    %v94 = vld [vmem:[#allocation7 + $0x10] sm:$0xff]
    %v95 = vld [vmem:[#allocation7 + $0x18] sm:$0xff]
    %v96 = vld [vmem:[#allocation7 + $0x20] sm:$0xff]
    %v97 = vld [vmem:[#allocation7 + $0x28] sm:$0xff]
    %v98 = vld [vmem:[#allocation7 + $0x30] sm:$0xff]
    %v99 = vld [vmem:[#allocation7 + $0x38] sm:$0xff]
    %v100 = vld [vmem:[#allocation7 + $0x40] sm:$0xff]
    %v101 = vld [vmem:[#allocation7 + $0x48] sm:$0xff]
    %v102 = vld [vmem:[#allocation7 + $0x50] sm:$0xff]
    %v103 = vld [vmem:[#allocation7 + $0x58] sm:$0xff]
    %v104 = vld [vmem:[#allocation7 + $0x60] sm:$0xff]
    %v105 = vld [vmem:[#allocation7 + $0x68] sm:$0xff]
    %v106 = vld [vmem:[#allocation7 + $0x70] sm:$0xff]
    %v107 = vld [vmem:[#allocation7 + $0x78] sm:$0xff]
    %v108 = vld [vmem:[%s3] sm:$0x1]
    %v110 = vlaneseq
    %v111 = vshrl.u32 %v110, 7
    %v112 = vsub.s32 0, %v111
    %v113 = vrot.slane %v108, %v112
    %115 = vmatprep.subr.mxu0 0.0
    %116 = vmatpush1.msra.mxu0 %v92
    %117 = vmatprep.subr.mxu0 0.0
    %118 = vmatpush1.msra.mxu0 %v93
    %119 = vmatprep.subr.mxu0 0.0
    %120 = vmatpush1.msra.mxu0 %v94
    %121 = vmatprep.subr.mxu0 0.0
    %122 = vmatpush1.msra.mxu0 %v95
    %123 = vmatprep.subr.mxu0 0.0
    %124 = vmatpush1.msra.mxu0 %v96
    %125 = vmatprep.subr.mxu0 0.0
    %126 = vmatpush1.msra.mxu0 %v97
    %127 = vmatprep.subr.mxu0 0.0
    %128 = vmatpush1.msra.mxu0 %v98
    %129 = vmatprep.subr.mxu0 0.0
    %130 = vmatpush1.msra.mxu0 %v99
    %131 = vmatprep.subr.mxu0 0.0
    %132 = vmatpush1.msra.mxu0 %v100
    %133 = vmatprep.subr.mxu0 0.0
    %134 = vmatpush1.msra.mxu0 %v101
    %135 = vmatprep.subr.mxu0 0.0
    %136 = vmatpush1.msra.mxu0 %v102
    %137 = vmatprep.subr.mxu0 0.0
    %138 = vmatpush1.msra.mxu0 %v103
    %139 = vmatprep.subr.mxu0 0.0
    %140 = vmatpush1.msra.mxu0 %v104
    %141 = vmatprep.subr.mxu0 0.0
    %142 = vmatpush1.msra.mxu0 %v105
    %143 = vmatprep.subr.mxu0 0.0
    %144 = vmatpush1.msra.mxu0 %v106
    %145 = vmatprep.subr.mxu0 0.0
    %146 = vmatpush1.msra.mxu0 %v107
    %147 = vmatprep.subr.mxu0 0.0
    %148 = vmatpush1.msra.mxu0 0.0
    %149 = vmatprep.subr.mxu0 0.0
    %150 = vmatpush1.msra.mxu0 0.0
    %151 = vmatprep.subr.mxu0 0.0
    %152 = vmatpush1.msra.mxu0 0.0
    %153 = vmatprep.subr.mxu0 0.0
    %154 = vmatpush1.msra.mxu0 0.0
    %155 = vmatprep.subr.mxu0 0.0
    %156 = vmatpush1.msra.mxu0 0.0
    %157 = vmatprep.subr.mxu0 0.0
    %158 = vmatpush1.msra.mxu0 0.0
    %159 = vmatprep.subr.mxu0 0.0
    %160 = vmatpush1.msra.mxu0 0.0
    %161 = vmatprep.subr.mxu0 0.0
    %162 = vmatpush1.msra.mxu0 0.0
    %163 = vmatprep.subr.mxu0 0.0
    %164 = vmatpush1.msra.mxu0 0.0
    %165 = vmatprep.subr.mxu0 0.0
    %166 = vmatpush1.msra.mxu0 0.0
    %167 = vmatprep.subr.mxu0 0.0
    %168 = vmatpush1.msra.mxu0 0.0
    %169 = vmatprep.subr.mxu0 0.0
    %170 = vmatpush1.msra.mxu0 0.0
    %171 = vmatprep.subr.mxu0 0.0
    %172 = vmatpush1.msra.mxu0 0.0
    %173 = vmatprep.subr.mxu0 0.0
    %174 = vmatpush1.msra.mxu0 0.0
    %175 = vmatprep.subr.mxu0 0.0
    %176 = vmatpush1.msra.mxu0 0.0
    %177 = vmatprep.subr.mxu0 0.0
    %178 = vmatpush1.msra.mxu0 0.0
    %179 = vmatprep.mubr.f32.mxu0 0.0
    %180 = vmatmul.mubr.f32.gmra.mrb[0].mxu0 %v84
    %v181 = vpop.f32.mrb[0].mxu0
    %v182 = vadd.f32 %v113, %v181
    %v183 = vpop.f32.mrb[0].mxu0
    %184 = vmatprep.mubr.f32.mxu0 0.0
    %185 = vmatmul.mubr.f32.gmra.mrb[0].mxu0 %v85
    %v186 = vpop.f32.mrb[0].mxu0
    %v187 = vadd.f32 %v113, %v186
    %v188 = vpop.f32.mrb[0].mxu0
    %189 = vmatprep.mubr.f32.mxu0 0.0
    %190 = vmatmul.mubr.f32.gmra.mrb[0].mxu0 %v86
    %v191 = vpop.f32.mrb[0].mxu0
    %v192 = vadd.f32 %v113, %v191
    %v193 = vpop.f32.mrb[0].mxu0
    %194 = vmatprep.mubr.f32.mxu0 0.0
    %195 = vmatmul.mubr.f32.gmra.mrb[0].mxu0 %v87
    %v196 = vpop.f32.mrb[0].mxu0
    %v197 = vadd.f32 %v113, %v196
    %v198 = vpop.f32.mrb[0].mxu0
    %199 = vmatprep.mubr.f32.mxu0 0.0
    %200 = vmatmul.mubr.f32.gmra.mrb[0].mxu0 %v88
    %v201 = vpop.f32.mrb[0].mxu0
    %v202 = vadd.f32 %v113, %v201
    %v203 = vpop.f32.mrb[0].mxu0
    %204 = vmatprep.mubr.f32.mxu0 0.0
    %205 = vmatmul.mubr.f32.gmra.mrb[0].mxu0 %v89
    %v206 = vpop.f32.mrb[0].mxu0
    %v207 = vadd.f32 %v113, %v206
    %v208 = vpop.f32.mrb[0].mxu0
    %209 = vmatprep.mubr.f32.mxu0 0.0
    %210 = vmatmul.mubr.f32.gmra.mrb[0].mxu0 %v90
    %v211 = vpop.f32.mrb[0].mxu0
    %v212 = vadd.f32 %v113, %v211
    %v213 = vpop.f32.mrb[0].mxu0
    %214 = vmatprep.mubr.f32.mxu0 0.0
    %215 = vmatmul.mubr.f32.gmra.mrb[0].mxu0 %v91
    %v216 = vpop.f32.mrb[0].mxu0
    %v217 = vadd.f32 %v113, %v216
    %v218 = vpop.f32.mrb[0].mxu0
    %219 = vdwg.mxu0
    %220 = vst [vmem:[#allocation3] sm:$0xff] %v182
    %221 = vst [vmem:[#allocation3 + $0x8] sm:$0xff] %v187
    %222 = vst [vmem:[#allocation3 + $0x10] sm:$0xff] %v192
    %223 = vst [vmem:[#allocation3 + $0x18] sm:$0xff] %v197
    %224 = vst [vmem:[#allocation3 + $0x20] sm:$0xff] %v202
    %225 = vst [vmem:[#allocation3 + $0x28] sm:$0xff] %v207
    %226 = vst [vmem:[#allocation3 + $0x30] sm:$0xff] %v212
    %227 = vst [vmem:[#allocation3 + $0x38] sm:$0xff] %v217
    %v228 = vld [vmem:[#allocation9] sm:$0xff]
    %v229 = vld [vmem:[#allocation9 + $0x8] sm:$0xff]
    %v230 = vld [vmem:[#allocation9 + $0x10] sm:$0xff]
    %v231 = vld [vmem:[#allocation9 + $0x18] sm:$0xff]
    %v232 = vld [vmem:[#allocation9 + $0x20] sm:$0xff]
    %v233 = vld [vmem:[#allocation9 + $0x28] sm:$0xff]
    %v234 = vld [vmem:[#allocation9 + $0x30] sm:$0xff]
    %v235 = vld [vmem:[#allocation9 + $0x38] sm:$0xff]
    %v236 = vld [vmem:[#allocation9 + $0x40] sm:$0xff]
    %v237 = vld [vmem:[#allocation9 + $0x48] sm:$0xff]
    %v238 = vld [vmem:[#allocation9 + $0x50] sm:$0xff]
    %v239 = vld [vmem:[#allocation9 + $0x58] sm:$0xff]
    %v240 = vld [vmem:[#allocation9 + $0x60] sm:$0xff]
    %v241 = vld [vmem:[#allocation9 + $0x68] sm:$0xff]
    %v242 = vld [vmem:[#allocation9 + $0x70] sm:$0xff]
    %v243 = vld [vmem:[#allocation9 + $0x78] sm:$0xff]
    %v244 = vld [vmem:[#allocation2] sm:$0xff]
    %v245 = vld [vmem:[#allocation3] sm:$0xff]
    %246 = vmatprep.subr.mxu0 0.0
    %247 = vmatpush1.msra.mxu0 %v228
    %248 = vmatprep.subr.mxu0 0.0
    %249 = vmatpush1.msra.mxu0 %v229
    %250 = vmatprep.subr.mxu0 0.0
    %251 = vmatpush1.msra.mxu0 %v230
    %252 = vmatprep.subr.mxu0 0.0
    %253 = vmatpush1.msra.mxu0 %v231
    %254 = vmatprep.subr.mxu0 0.0
    %255 = vmatpush1.msra.mxu0 %v232
    %256 = vmatprep.subr.mxu0 0.0
    %257 = vmatpush1.msra.mxu0 %v233
    %258 = vmatprep.subr.mxu0 0.0
    %259 = vmatpush1.msra.mxu0 %v234
    %260 = vmatprep.subr.mxu0 0.0
    %261 = vmatpush1.msra.mxu0 %v235
    %262 = vmatprep.subr.mxu0 0.0
    %263 = vmatpush1.msra.mxu0 %v236
    %264 = vmatprep.subr.mxu0 0.0
    %265 = vmatpush1.msra.mxu0 %v237
    %266 = vmatprep.subr.mxu0 0.0
    %267 = vmatpush1.msra.mxu0 %v238
    %268 = vmatprep.subr.mxu0 0.0
    %269 = vmatpush1.msra.mxu0 %v239
    %270 = vmatprep.subr.mxu0 0.0
    %271 = vmatpush1.msra.mxu0 %v240
    %272 = vmatprep.subr.mxu0 0.0
    %273 = vmatpush1.msra.mxu0 %v241
    %274 = vmatprep.subr.mxu0 0.0
    %275 = vmatpush1.msra.mxu0 %v242
    %276 = vmatprep.subr.mxu0 0.0
    %277 = vmatpush1.msra.mxu0 %v243
    %278 = vmatprep.subr.mxu0 0.0
    %279 = vmatpush1.msra.mxu0 0.0
    %280 = vmatprep.subr.mxu0 0.0
    %281 = vmatpush1.msra.mxu0 0.0
    %282 = vmatprep.subr.mxu0 0.0
    %283 = vmatpush1.msra.mxu0 0.0
    %284 = vmatprep.subr.mxu0 0.0
    %285 = vmatpush1.msra.mxu0 0.0
    %286 = vmatprep.subr.mxu0 0.0
    %287 = vmatpush1.msra.mxu0 0.0
    %288 = vmatprep.subr.mxu0 0.0
    %289 = vmatpush1.msra.mxu0 0.0
    %290 = vmatprep.subr.mxu0 0.0
    %291 = vmatpush1.msra.mxu0 0.0
    %292 = vmatprep.subr.mxu0 0.0
    %293 = vmatpush1.msra.mxu0 0.0
    %294 = vmatprep.subr.mxu0 0.0
    %295 = vmatpush1.msra.mxu0 0.0
    %296 = vmatprep.subr.mxu0 0.0
    %297 = vmatpush1.msra.mxu0 0.0
    %298 = vmatprep.subr.mxu0 0.0
    %299 = vmatpush1.msra.mxu0 0.0
    %300 = vmatprep.subr.mxu0 0.0
    %301 = vmatpush1.msra.mxu0 0.0
    %302 = vmatprep.subr.mxu0 0.0
    %303 = vmatpush1.msra.mxu0 0.0
    %304 = vmatprep.subr.mxu0 0.0
    %305 = vmatpush1.msra.mxu0 0.0
    %306 = vmatprep.subr.mxu0 0.0
    %307 = vmatpush1.msra.mxu0 0.0
    %308 = vmatprep.subr.mxu0 0.0
    %309 = vmatpush1.msra.mxu0 0.0
    %310 = vmatprep.mubr.f32.mxu0 0.0
    %311 = vmatmul.mubr.f32.gmra.mrb[0].mxu0 %v244
    %v312 = vpop.f32.mrb[0].mxu0
    %v313 = vadd.f32 0.0, %v312
    %v314 = vpop.f32.mrb[0].mxu0
    %315 = vdwg.mxu0
    %v316 = vadd.f32 %v245, %v313
    %v317 = vtanh.pop %v316
    %s318 = scalar_lea.vmem [#allocation3], 8
    %v319 = vld [vmem:[%s318] sm:$0xff]
    %320 = vmatprep.subr.mxu0 0.0
    %321 = vmatpush1.msra.mxu0 %v228
    %322 = vmatprep.subr.mxu0 0.0
    %323 = vmatpush1.msra.mxu0 %v229
    %324 = vmatprep.subr.mxu0 0.0
    %325 = vmatpush1.msra.mxu0 %v230
    %326 = vmatprep.subr.mxu0 0.0
    %327 = vmatpush1.msra.mxu0 %v231
    %328 = vmatprep.subr.mxu0 0.0
    %329 = vmatpush1.msra.mxu0 %v232
    %330 = vmatprep.subr.mxu0 0.0
    %331 = vmatpush1.msra.mxu0 %v233
    %332 = vmatprep.subr.mxu0 0.0
    %333 = vmatpush1.msra.mxu0 %v234
    %334 = vmatprep.subr.mxu0 0.0
    %335 = vmatpush1.msra.mxu0 %v235
    %336 = vmatprep.subr.mxu0 0.0
    %337 = vmatpush1.msra.mxu0 %v236
    %338 = vmatprep.subr.mxu0 0.0
    %339 = vmatpush1.msra.mxu0 %v237
    %340 = vmatprep.subr.mxu0 0.0
    %341 = vmatpush1.msra.mxu0 %v238
    %342 = vmatprep.subr.mxu0 0.0
    %343 = vmatpush1.msra.mxu0 %v239
    %344 = vmatprep.subr.mxu0 0.0
    %345 = vmatpush1.msra.mxu0 %v240
    %346 = vmatprep.subr.mxu0 0.0
    %347 = vmatpush1.msra.mxu0 %v241
    %348 = vmatprep.subr.mxu0 0.0
    %349 = vmatpush1.msra.mxu0 %v242
    %350 = vmatprep.subr.mxu0 0.0
    %351 = vmatpush1.msra.mxu0 %v243
    %352 = vmatprep.subr.mxu0 0.0
    %353 = vmatpush1.msra.mxu0 0.0
    %354 = vmatprep.subr.mxu0 0.0
    %355 = vmatpush1.msra.mxu0 0.0
    %356 = vmatprep.subr.mxu0 0.0
    %357 = vmatpush1.msra.mxu0 0.0
    %358 = vmatprep.subr.mxu0 0.0
    %359 = vmatpush1.msra.mxu0 0.0
    %360 = vmatprep.subr.mxu0 0.0
    %361 = vmatpush1.msra.mxu0 0.0
    %362 = vmatprep.subr.mxu0 0.0
    %363 = vmatpush1.msra.mxu0 0.0
    %364 = vmatprep.subr.mxu0 0.0
    %365 = vmatpush1.msra.mxu0 0.0
    %366 = vmatprep.subr.mxu0 0.0
    %367 = vmatpush1.msra.mxu0 0.0
    %368 = vmatprep.subr.mxu0 0.0
    %369 = vmatpush1.msra.mxu0 0.0
    %370 = vmatprep.subr.mxu0 0.0
    %371 = vmatpush1.msra.mxu0 0.0
    %372 = vmatprep.subr.mxu0 0.0
    %373 = vmatpush1.msra.mxu0 0.0
    %374 = vmatprep.subr.mxu0 0.0
    %375 = vmatpush1.msra.mxu0 0.0
    %376 = vmatprep.subr.mxu0 0.0
    %377 = vmatpush1.msra.mxu0 0.0
    %378 = vmatprep.subr.mxu0 0.0
    %379 = vmatpush1.msra.mxu0 0.0
    %380 = vmatprep.subr.mxu0 0.0
    %381 = vmatpush1.msra.mxu0 0.0
    %382 = vmatprep.subr.mxu0 0.0
    %383 = vmatpush1.msra.mxu0 0.0
    %384 = vmatprep.mubr.f32.mxu0 0.0
    %385 = vmatmul.mubr.f32.gmra.mrb[0].mxu0 %v317
    %v386 = vpop.f32.mrb[0].mxu0
    %v387 = vadd.f32 0.0, %v386
    %v388 = vpop.f32.mrb[0].mxu0
    %389 = vdwg.mxu0
    %v390 = vadd.f32 %v319, %v387
    %v391 = vtanh.pop %v390
    %s392 = scalar_lea.vmem [#allocation3], 16
    %v393 = vld [vmem:[%s392] sm:$0xff]
    %394 = vmatprep.subr.mxu0 0.0
    %395 = vmatpush1.msra.mxu0 %v228
    %396 = vmatprep.subr.mxu0 0.0
    %397 = vmatpush1.msra.mxu0 %v229
    %398 = vmatprep.subr.mxu0 0.0
    %399 = vmatpush1.msra.mxu0 %v230
    %400 = vmatprep.subr.mxu0 0.0
    %401 = vmatpush1.msra.mxu0 %v231
    %402 = vmatprep.subr.mxu0 0.0
    %403 = vmatpush1.msra.mxu0 %v232
    %404 = vmatprep.subr.mxu0 0.0
    %405 = vmatpush1.msra.mxu0 %v233
    %406 = vmatprep.subr.mxu0 0.0
    %407 = vmatpush1.msra.mxu0 %v234
    %408 = vmatprep.subr.mxu0 0.0
    %409 = vmatpush1.msra.mxu0 %v235
    %410 = vmatprep.subr.mxu0 0.0
    %411 = vmatpush1.msra.mxu0 %v236
    %412 = vmatprep.subr.mxu0 0.0
    %413 = vmatpush1.msra.mxu0 %v237
    %414 = vmatprep.subr.mxu0 0.0
    %415 = vmatpush1.msra.mxu0 %v238
    %416 = vmatprep.subr.mxu0 0.0
    %417 = vmatpush1.msra.mxu0 %v239
    %418 = vmatprep.subr.mxu0 0.0
    %419 = vmatpush1.msra.mxu0 %v240
    %420 = vmatprep.subr.mxu0 0.0
    %421 = vmatpush1.msra.mxu0 %v241
    %422 = vmatprep.subr.mxu0 0.0
    %423 = vmatpush1.msra.mxu0 %v242
    %424 = vmatprep.subr.mxu0 0.0
    %425 = vmatpush1.msra.mxu0 %v243
    %426 = vmatprep.subr.mxu0 0.0
    %427 = vmatpush1.msra.mxu0 0.0
    %428 = vmatprep.subr.mxu0 0.0
    %429 = vmatpush1.msra.mxu0 0.0
    %430 = vmatprep.subr.mxu0 0.0
    %431 = vmatpush1.msra.mxu0 0.0
    %432 = vmatprep.subr.mxu0 0.0
    %433 = vmatpush1.msra.mxu0 0.0
    %434 = vmatprep.subr.mxu0 0.0
    %435 = vmatpush1.msra.mxu0 0.0
    %436 = vmatprep.subr.mxu0 0.0
    %437 = vmatpush1.msra.mxu0 0.0
    %438 = vmatprep.subr.mxu0 0.0
    %439 = vmatpush1.msra.mxu0 0.0
    %440 = vmatprep.subr.mxu0 0.0
    %441 = vmatpush1.msra.mxu0 0.0
    %442 = vmatprep.subr.mxu0 0.0
    %443 = vmatpush1.msra.mxu0 0.0
    %444 = vmatprep.subr.mxu0 0.0
    %445 = vmatpush1.msra.mxu0 0.0
    %446 = vmatprep.subr.mxu0 0.0
    %447 = vmatpush1.msra.mxu0 0.0
    %448 = vmatprep.subr.mxu0 0.0
    %449 = vmatpush1.msra.mxu0 0.0
    %450 = vmatprep.subr.mxu0 0.0
    %451 = vmatpush1.msra.mxu0 0.0
    %452 = vmatprep.subr.mxu0 0.0
    %453 = vmatpush1.msra.mxu0 0.0
    %454 = vmatprep.subr.mxu0 0.0
    %455 = vmatpush1.msra.mxu0 0.0
    %456 = vmatprep.subr.mxu0 0.0
    %457 = vmatpush1.msra.mxu0 0.0
    %458 = vmatprep.mubr.f32.mxu0 0.0
    %459 = vmatmul.mubr.f32.gmra.mrb[0].mxu0 %v391
    %v460 = vpop.f32.mrb[0].mxu0
    %v461 = vadd.f32 0.0, %v460
    %v462 = vpop.f32.mrb[0].mxu0
    %463 = vdwg.mxu0
    %v464 = vadd.f32 %v393, %v461
    %v465 = vtanh.pop %v464
    %s466 = scalar_lea.vmem [#allocation3], 24
    %v467 = vld [vmem:[%s466] sm:$0xff]
    %468 = vmatprep.subr.mxu0 0.0
    %469 = vmatpush1.msra.mxu0 %v228
    %470 = vmatprep.subr.mxu0 0.0
    %471 = vmatpush1.msra.mxu0 %v229
    %472 = vmatprep.subr.mxu0 0.0
    %473 = vmatpush1.msra.mxu0 %v230
    %474 = vmatprep.subr.mxu0 0.0
    %475 = vmatpush1.msra.mxu0 %v231
    %476 = vmatprep.subr.mxu0 0.0
    %477 = vmatpush1.msra.mxu0 %v232
    %478 = vmatprep.subr.mxu0 0.0
    %479 = vmatpush1.msra.mxu0 %v233
    %480 = vmatprep.subr.mxu0 0.0
    %481 = vmatpush1.msra.mxu0 %v234
    %482 = vmatprep.subr.mxu0 0.0
    %483 = vmatpush1.msra.mxu0 %v235
    %484 = vmatprep.subr.mxu0 0.0
    %485 = vmatpush1.msra.mxu0 %v236
    %486 = vmatprep.subr.mxu0 0.0
    %487 = vmatpush1.msra.mxu0 %v237
    %488 = vmatprep.subr.mxu0 0.0
    %489 = vmatpush1.msra.mxu0 %v238
    %490 = vmatprep.subr.mxu0 0.0
    %491 = vmatpush1.msra.mxu0 %v239
    %492 = vmatprep.subr.mxu0 0.0
    %493 = vmatpush1.msra.mxu0 %v240
    %494 = vmatprep.subr.mxu0 0.0
    %495 = vmatpush1.msra.mxu0 %v241
    %496 = vmatprep.subr.mxu0 0.0
    %497 = vmatpush1.msra.mxu0 %v242
    %498 = vmatprep.subr.mxu0 0.0
    %499 = vmatpush1.msra.mxu0 %v243
    %500 = vmatprep.subr.mxu0 0.0
    %501 = vmatpush1.msra.mxu0 0.0
    %502 = vmatprep.subr.mxu0 0.0
    %503 = vmatpush1.msra.mxu0 0.0
    %504 = vmatprep.subr.mxu0 0.0
    %505 = vmatpush1.msra.mxu0 0.0
    %506 = vmatprep.subr.mxu0 0.0
    %507 = vmatpush1.msra.mxu0 0.0
    %508 = vmatprep.subr.mxu0 0.0
    %509 = vmatpush1.msra.mxu0 0.0
    %510 = vmatprep.subr.mxu0 0.0
    %511 = vmatpush1.msra.mxu0 0.0
    %512 = vmatprep.subr.mxu0 0.0
    %513 = vmatpush1.msra.mxu0 0.0
    %514 = vmatprep.subr.mxu0 0.0
    %515 = vmatpush1.msra.mxu0 0.0
    %516 = vmatprep.subr.mxu0 0.0
    %517 = vmatpush1.msra.mxu0 0.0
    %518 = vmatprep.subr.mxu0 0.0
    %519 = vmatpush1.msra.mxu0 0.0
    %520 = vmatprep.subr.mxu0 0.0
    %521 = vmatpush1.msra.mxu0 0.0
    %522 = vmatprep.subr.mxu0 0.0
    %523 = vmatpush1.msra.mxu0 0.0
    %524 = vmatprep.subr.mxu0 0.0
    %525 = vmatpush1.msra.mxu0 0.0
    %526 = vmatprep.subr.mxu0 0.0
    %527 = vmatpush1.msra.mxu0 0.0
    %528 = vmatprep.subr.mxu0 0.0
    %529 = vmatpush1.msra.mxu0 0.0
    %530 = vmatprep.subr.mxu0 0.0
    %531 = vmatpush1.msra.mxu0 0.0
    %532 = vmatprep.mubr.f32.mxu0 0.0
    %533 = vmatmul.mubr.f32.gmra.mrb[0].mxu0 %v465
    %v534 = vpop.f32.mrb[0].mxu0
    %v535 = vadd.f32 0.0, %v534
    %v536 = vpop.f32.mrb[0].mxu0
    %537 = vdwg.mxu0
    %v538 = vadd.f32 %v467, %v535
    %v539 = vtanh.pop %v538
    %s540 = scalar_lea.vmem [#allocation3], 32
    %v541 = vld [vmem:[%s540] sm:$0xff]
    %542 = vmatprep.subr.mxu0 0.0
    %543 = vmatpush1.msra.mxu0 %v228
    %544 = vmatprep.subr.mxu0 0.0
    %545 = vmatpush1.msra.mxu0 %v229
    %546 = vmatprep.subr.mxu0 0.0
    %547 = vmatpush1.msra.mxu0 %v230
    %548 = vmatprep.subr.mxu0 0.0
    %549 = vmatpush1.msra.mxu0 %v231
    %550 = vmatprep.subr.mxu0 0.0
    %551 = vmatpush1.msra.mxu0 %v232
    %552 = vmatprep.subr.mxu0 0.0
    %553 = vmatpush1.msra.mxu0 %v233
    %554 = vmatprep.subr.mxu0 0.0
    %555 = vmatpush1.msra.mxu0 %v234
    %556 = vmatprep.subr.mxu0 0.0
    %557 = vmatpush1.msra.mxu0 %v235
    %558 = vmatprep.subr.mxu0 0.0
    %559 = vmatpush1.msra.mxu0 %v236
    %560 = vmatprep.subr.mxu0 0.0
    %561 = vmatpush1.msra.mxu0 %v237
    %562 = vmatprep.subr.mxu0 0.0
    %563 = vmatpush1.msra.mxu0 %v238
    %564 = vmatprep.subr.mxu0 0.0
    %565 = vmatpush1.msra.mxu0 %v239
    %566 = vmatprep.subr.mxu0 0.0
    %567 = vmatpush1.msra.mxu0 %v240
    %568 = vmatprep.subr.mxu0 0.0
    %569 = vmatpush1.msra.mxu0 %v241
    %570 = vmatprep.subr.mxu0 0.0
    %571 = vmatpush1.msra.mxu0 %v242
    %572 = vmatprep.subr.mxu0 0.0
    %573 = vmatpush1.msra.mxu0 %v243
    %574 = vmatprep.subr.mxu0 0.0
    %575 = vmatpush1.msra.mxu0 0.0
    %576 = vmatprep.subr.mxu0 0.0
    %577 = vmatpush1.msra.mxu0 0.0
    %578 = vmatprep.subr.mxu0 0.0
    %579 = vmatpush1.msra.mxu0 0.0
    %580 = vmatprep.subr.mxu0 0.0
    %581 = vmatpush1.msra.mxu0 0.0
    %582 = vmatprep.subr.mxu0 0.0
    %583 = vmatpush1.msra.mxu0 0.0
    %584 = vmatprep.subr.mxu0 0.0
    %585 = vmatpush1.msra.mxu0 0.0
    %586 = vmatprep.subr.mxu0 0.0
    %587 = vmatpush1.msra.mxu0 0.0
    %588 = vmatprep.subr.mxu0 0.0
    %589 = vmatpush1.msra.mxu0 0.0
    %590 = vmatprep.subr.mxu0 0.0
    %591 = vmatpush1.msra.mxu0 0.0
    %592 = vmatprep.subr.mxu0 0.0
    %593 = vmatpush1.msra.mxu0 0.0
    %594 = vmatprep.subr.mxu0 0.0
    %595 = vmatpush1.msra.mxu0 0.0
    %596 = vmatprep.subr.mxu0 0.0
    %597 = vmatpush1.msra.mxu0 0.0
    %598 = vmatprep.subr.mxu0 0.0
    %599 = vmatpush1.msra.mxu0 0.0
    %600 = vmatprep.subr.mxu0 0.0
    %601 = vmatpush1.msra.mxu0 0.0
    %602 = vmatprep.subr.mxu0 0.0
    %603 = vmatpush1.msra.mxu0 0.0
    %604 = vmatprep.subr.mxu0 0.0
    %605 = vmatpush1.msra.mxu0 0.0
    %606 = vmatprep.mubr.f32.mxu0 0.0
    %607 = vmatmul.mubr.f32.gmra.mrb[0].mxu0 %v539
    %v608 = vpop.f32.mrb[0].mxu0
    %v609 = vadd.f32 0.0, %v608
    %v610 = vpop.f32.mrb[0].mxu0
    %611 = vdwg.mxu0
    %v612 = vadd.f32 %v541, %v609
    %v613 = vtanh.pop %v612
    %s614 = scalar_lea.vmem [#allocation3], 40
    %v615 = vld [vmem:[%s614] sm:$0xff]
    %616 = vmatprep.subr.mxu0 0.0
    %617 = vmatpush1.msra.mxu0 %v228
    %618 = vmatprep.subr.mxu0 0.0
    %619 = vmatpush1.msra.mxu0 %v229
    %620 = vmatprep.subr.mxu0 0.0
    %621 = vmatpush1.msra.mxu0 %v230
    %622 = vmatprep.subr.mxu0 0.0
    %623 = vmatpush1.msra.mxu0 %v231
    %624 = vmatprep.subr.mxu0 0.0
    %625 = vmatpush1.msra.mxu0 %v232
    %626 = vmatprep.subr.mxu0 0.0
    %627 = vmatpush1.msra.mxu0 %v233
    %628 = vmatprep.subr.mxu0 0.0
    %629 = vmatpush1.msra.mxu0 %v234
    %630 = vmatprep.subr.mxu0 0.0
    %631 = vmatpush1.msra.mxu0 %v235
    %632 = vmatprep.subr.mxu0 0.0
    %633 = vmatpush1.msra.mxu0 %v236
    %634 = vmatprep.subr.mxu0 0.0
    %635 = vmatpush1.msra.mxu0 %v237
    %636 = vmatprep.subr.mxu0 0.0
    %637 = vmatpush1.msra.mxu0 %v238
    %638 = vmatprep.subr.mxu0 0.0
    %639 = vmatpush1.msra.mxu0 %v239
    %640 = vmatprep.subr.mxu0 0.0
    %641 = vmatpush1.msra.mxu0 %v240
    %642 = vmatprep.subr.mxu0 0.0
    %643 = vmatpush1.msra.mxu0 %v241
    %644 = vmatprep.subr.mxu0 0.0
    %645 = vmatpush1.msra.mxu0 %v242
    %646 = vmatprep.subr.mxu0 0.0
    %647 = vmatpush1.msra.mxu0 %v243
    %648 = vmatprep.subr.mxu0 0.0
    %649 = vmatpush1.msra.mxu0 0.0
    %650 = vmatprep.subr.mxu0 0.0
    %651 = vmatpush1.msra.mxu0 0.0
    %652 = vmatprep.subr.mxu0 0.0
    %653 = vmatpush1.msra.mxu0 0.0
    %654 = vmatprep.subr.mxu0 0.0
    %655 = vmatpush1.msra.mxu0 0.0
    %656 = vmatprep.subr.mxu0 0.0
    %657 = vmatpush1.msra.mxu0 0.0
    %658 = vmatprep.subr.mxu0 0.0
    %659 = vmatpush1.msra.mxu0 0.0
    %660 = vmatprep.subr.mxu0 0.0
    %661 = vmatpush1.msra.mxu0 0.0
    %662 = vmatprep.subr.mxu0 0.0
    %663 = vmatpush1.msra.mxu0 0.0
    %664 = vmatprep.subr.mxu0 0.0
    %665 = vmatpush1.msra.mxu0 0.0
    %666 = vmatprep.subr.mxu0 0.0
    %667 = vmatpush1.msra.mxu0 0.0
    %668 = vmatprep.subr.mxu0 0.0
    %669 = vmatpush1.msra.mxu0 0.0
    %670 = vmatprep.subr.mxu0 0.0
    %671 = vmatpush1.msra.mxu0 0.0
    %672 = vmatprep.subr.mxu0 0.0
    %673 = vmatpush1.msra.mxu0 0.0
    %674 = vmatprep.subr.mxu0 0.0
    %675 = vmatpush1.msra.mxu0 0.0
    %676 = vmatprep.subr.mxu0 0.0
    %677 = vmatpush1.msra.mxu0 0.0
    %678 = vmatprep.subr.mxu0 0.0
    %679 = vmatpush1.msra.mxu0 0.0
    %680 = vmatprep.mubr.f32.mxu0 0.0
    %681 = vmatmul.mubr.f32.gmra.mrb[0].mxu0 %v613
    %v682 = vpop.f32.mrb[0].mxu0
    %v683 = vadd.f32 0.0, %v682
    %v684 = vpop.f32.mrb[0].mxu0
    %685 = vdwg.mxu0
    %v686 = vadd.f32 %v615, %v683
    %v687 = vtanh.pop %v686
    %s688 = scalar_lea.vmem [#allocation3], 48
    %v689 = vld [vmem:[%s688] sm:$0xff]
    %690 = vmatprep.subr.mxu0 0.0
    %691 = vmatpush1.msra.mxu0 %v228
    %692 = vmatprep.subr.mxu0 0.0
    %693 = vmatpush1.msra.mxu0 %v229
    %694 = vmatprep.subr.mxu0 0.0
    %695 = vmatpush1.msra.mxu0 %v230
    %696 = vmatprep.subr.mxu0 0.0
    %697 = vmatpush1.msra.mxu0 %v231
    %698 = vmatprep.subr.mxu0 0.0
    %699 = vmatpush1.msra.mxu0 %v232
    %700 = vmatprep.subr.mxu0 0.0
    %701 = vmatpush1.msra.mxu0 %v233
    %702 = vmatprep.subr.mxu0 0.0
    %703 = vmatpush1.msra.mxu0 %v234
    %704 = vmatprep.subr.mxu0 0.0
    %705 = vmatpush1.msra.mxu0 %v235
    %706 = vmatprep.subr.mxu0 0.0
    %707 = vmatpush1.msra.mxu0 %v236
    %708 = vmatprep.subr.mxu0 0.0
    %709 = vmatpush1.msra.mxu0 %v237
    %710 = vmatprep.subr.mxu0 0.0
    %711 = vmatpush1.msra.mxu0 %v238
    %712 = vmatprep.subr.mxu0 0.0
    %713 = vmatpush1.msra.mxu0 %v239
    %714 = vmatprep.subr.mxu0 0.0
    %715 = vmatpush1.msra.mxu0 %v240
    %716 = vmatprep.subr.mxu0 0.0
    %717 = vmatpush1.msra.mxu0 %v241
    %718 = vmatprep.subr.mxu0 0.0
    %719 = vmatpush1.msra.mxu0 %v242
    %720 = vmatprep.subr.mxu0 0.0
    %721 = vmatpush1.msra.mxu0 %v243
    %722 = vmatprep.subr.mxu0 0.0
    %723 = vmatpush1.msra.mxu0 0.0
    %724 = vmatprep.subr.mxu0 0.0
    %725 = vmatpush1.msra.mxu0 0.0
    %726 = vmatprep.subr.mxu0 0.0
    %727 = vmatpush1.msra.mxu0 0.0
    %728 = vmatprep.subr.mxu0 0.0
    %729 = vmatpush1.msra.mxu0 0.0
    %730 = vmatprep.subr.mxu0 0.0
    %731 = vmatpush1.msra.mxu0 0.0
    %732 = vmatprep.subr.mxu0 0.0
    %733 = vmatpush1.msra.mxu0 0.0
    %734 = vmatprep.subr.mxu0 0.0
    %735 = vmatpush1.msra.mxu0 0.0
    %736 = vmatprep.subr.mxu0 0.0
    %737 = vmatpush1.msra.mxu0 0.0
    %738 = vmatprep.subr.mxu0 0.0
    %739 = vmatpush1.msra.mxu0 0.0
    %740 = vmatprep.subr.mxu0 0.0
    %741 = vmatpush1.msra.mxu0 0.0
    %742 = vmatprep.subr.mxu0 0.0
    %743 = vmatpush1.msra.mxu0 0.0
    %744 = vmatprep.subr.mxu0 0.0
    %745 = vmatpush1.msra.mxu0 0.0
    %746 = vmatprep.subr.mxu0 0.0
    %747 = vmatpush1.msra.mxu0 0.0
    %748 = vmatprep.subr.mxu0 0.0
    %749 = vmatpush1.msra.mxu0 0.0
    %750 = vmatprep.subr.mxu0 0.0
    %751 = vmatpush1.msra.mxu0 0.0
    %752 = vmatprep.subr.mxu0 0.0
    %753 = vmatpush1.msra.mxu0 0.0
    %754 = vmatprep.mubr.f32.mxu0 0.0
    %755 = vmatmul.mubr.f32.gmra.mrb[0].mxu0 %v687
    %v756 = vpop.f32.mrb[0].mxu0
    %v757 = vadd.f32 0.0, %v756
    %v758 = vpop.f32.mrb[0].mxu0
    %759 = vdwg.mxu0
    %v760 = vadd.f32 %v689, %v757
    %v761 = vtanh.pop %v760
    %s762 = scalar_lea.vmem [#allocation3], 56
    %v763 = vld [vmem:[%s762] sm:$0xff]
    %764 = vmatprep.subr.mxu0 0.0
    %765 = vmatpush1.msra.mxu0 %v228
    %766 = vmatprep.subr.mxu0 0.0
    %767 = vmatpush1.msra.mxu0 %v229
    %768 = vmatprep.subr.mxu0 0.0
    %769 = vmatpush1.msra.mxu0 %v230
    %770 = vmatprep.subr.mxu0 0.0
    %771 = vmatpush1.msra.mxu0 %v231
    %772 = vmatprep.subr.mxu0 0.0
    %773 = vmatpush1.msra.mxu0 %v232
    %774 = vmatprep.subr.mxu0 0.0
    %775 = vmatpush1.msra.mxu0 %v233
    %776 = vmatprep.subr.mxu0 0.0
    %777 = vmatpush1.msra.mxu0 %v234
    %778 = vmatprep.subr.mxu0 0.0
    %779 = vmatpush1.msra.mxu0 %v235
    %780 = vmatprep.subr.mxu0 0.0
    %781 = vmatpush1.msra.mxu0 %v236
    %782 = vmatprep.subr.mxu0 0.0
    %783 = vmatpush1.msra.mxu0 %v237
    %784 = vmatprep.subr.mxu0 0.0
    %785 = vmatpush1.msra.mxu0 %v238
    %786 = vmatprep.subr.mxu0 0.0
    %787 = vmatpush1.msra.mxu0 %v239
    %788 = vmatprep.subr.mxu0 0.0
    %789 = vmatpush1.msra.mxu0 %v240
    %790 = vmatprep.subr.mxu0 0.0
    %791 = vmatpush1.msra.mxu0 %v241
    %792 = vmatprep.subr.mxu0 0.0
    %793 = vmatpush1.msra.mxu0 %v242
    %794 = vmatprep.subr.mxu0 0.0
    %795 = vmatpush1.msra.mxu0 %v243
    %796 = vmatprep.subr.mxu0 0.0
    %797 = vmatpush1.msra.mxu0 0.0
    %798 = vmatprep.subr.mxu0 0.0
    %799 = vmatpush1.msra.mxu0 0.0
    %800 = vmatprep.subr.mxu0 0.0
    %801 = vmatpush1.msra.mxu0 0.0
    %802 = vmatprep.subr.mxu0 0.0
    %803 = vmatpush1.msra.mxu0 0.0
    %804 = vmatprep.subr.mxu0 0.0
    %805 = vmatpush1.msra.mxu0 0.0
    %806 = vmatprep.subr.mxu0 0.0
    %807 = vmatpush1.msra.mxu0 0.0
    %808 = vmatprep.subr.mxu0 0.0
    %809 = vmatpush1.msra.mxu0 0.0
    %810 = vmatprep.subr.mxu0 0.0
    %811 = vmatpush1.msra.mxu0 0.0
    %812 = vmatprep.subr.mxu0 0.0
    %813 = vmatpush1.msra.mxu0 0.0
    %814 = vmatprep.subr.mxu0 0.0
    %815 = vmatpush1.msra.mxu0 0.0
    %816 = vmatprep.subr.mxu0 0.0
    %817 = vmatpush1.msra.mxu0 0.0
    %818 = vmatprep.subr.mxu0 0.0
    %819 = vmatpush1.msra.mxu0 0.0
    %820 = vmatprep.subr.mxu0 0.0
    %821 = vmatpush1.msra.mxu0 0.0
    %822 = vmatprep.subr.mxu0 0.0
    %823 = vmatpush1.msra.mxu0 0.0
    %824 = vmatprep.subr.mxu0 0.0
    %825 = vmatpush1.msra.mxu0 0.0
    %826 = vmatprep.subr.mxu0 0.0
    %827 = vmatpush1.msra.mxu0 0.0
    %828 = vmatprep.mubr.f32.mxu0 0.0
    %829 = vmatmul.mubr.f32.gmra.mrb[0].mxu0 %v761
    %v830 = vpop.f32.mrb[0].mxu0
    %v831 = vadd.f32 0.0, %v830
    %v832 = vpop.f32.mrb[0].mxu0
    %833 = vdwg.mxu0
    %v834 = vadd.f32 %v763, %v831
    %v835 = vtanh.pop %v834
    %836 = vst [vmem:[#allocation2] sm:$0xff] %v835
    // Predicated region
    $region46: #{tpu_custom_call.1} parent=1 // pred_check
      %p837 = pneg %p79
    $region47: #{tpu_custom_call.1} parent=1 // pred_check_branch
      %839 = sbr.rel (%p837) target = $region49
    $region48: #{tpu_custom_call.1} parent=1 // pred_region
      %v840 = vld [vmem:[#allocation10] sm:$0xff]
      %v841 = vld [vmem:[#allocation10 + $0x8] sm:$0xff]
      %v842 = vld [vmem:[#allocation10 + $0x10] sm:$0xff]
      %v843 = vld [vmem:[#allocation10 + $0x18] sm:$0xff]
      %v844 = vld [vmem:[#allocation10 + $0x20] sm:$0xff]
      %v845 = vld [vmem:[#allocation10 + $0x28] sm:$0xff]
      %v846 = vld [vmem:[#allocation10 + $0x30] sm:$0xff]
      %v847 = vld [vmem:[#allocation10 + $0x38] sm:$0xff]
      %v848 = vld [vmem:[#allocation10 + $0x40] sm:$0xff]
      %v849 = vld [vmem:[#allocation10 + $0x48] sm:$0xff]
      %v850 = vld [vmem:[#allocation10 + $0x50] sm:$0xff]
      %v851 = vld [vmem:[#allocation10 + $0x58] sm:$0xff]
      %v852 = vld [vmem:[#allocation10 + $0x60] sm:$0xff]
      %v853 = vld [vmem:[#allocation10 + $0x68] sm:$0xff]
      %v854 = vld [vmem:[#allocation10 + $0x70] sm:$0xff]
      %v855 = vld [vmem:[#allocation10 + $0x78] sm:$0xff]
      %v856 = vld [vmem:[%s5] sm:$0x1]
      %v858 = vlaneseq
      %v859 = vshrl.u32 %v858, 7
      %v860 = vsub.s32 0, %v859
      %v861 = vrot.slane %v856, %v860
      %863 = vmatprep.subr.mxu0 0.0
      %864 = vmatpush1.msra.mxu0 %v840
      %865 = vmatprep.subr.mxu0 0.0
      %866 = vmatpush1.msra.mxu0 %v841
      %867 = vmatprep.subr.mxu0 0.0
      %868 = vmatpush1.msra.mxu0 %v842
      %869 = vmatprep.subr.mxu0 0.0
      %870 = vmatpush1.msra.mxu0 %v843
      %871 = vmatprep.subr.mxu0 0.0
      %872 = vmatpush1.msra.mxu0 %v844
      %873 = vmatprep.subr.mxu0 0.0
      %874 = vmatpush1.msra.mxu0 %v845
      %875 = vmatprep.subr.mxu0 0.0
      %876 = vmatpush1.msra.mxu0 %v846
      %877 = vmatprep.subr.mxu0 0.0
      %878 = vmatpush1.msra.mxu0 %v847
      %879 = vmatprep.subr.mxu0 0.0
      %880 = vmatpush1.msra.mxu0 %v848
      %881 = vmatprep.subr.mxu0 0.0
      %882 = vmatpush1.msra.mxu0 %v849
      %883 = vmatprep.subr.mxu0 0.0
      %884 = vmatpush1.msra.mxu0 %v850
      %885 = vmatprep.subr.mxu0 0.0
      %886 = vmatpush1.msra.mxu0 %v851
      %887 = vmatprep.subr.mxu0 0.0
      %888 = vmatpush1.msra.mxu0 %v852
      %889 = vmatprep.subr.mxu0 0.0
      %890 = vmatpush1.msra.mxu0 %v853
      %891 = vmatprep.subr.mxu0 0.0
      %892 = vmatpush1.msra.mxu0 %v854
      %893 = vmatprep.subr.mxu0 0.0
      %894 = vmatpush1.msra.mxu0 %v855
      %895 = vmatprep.subr.mxu0 0.0
      %896 = vmatpush1.msra.mxu0 0.0
      %897 = vmatprep.subr.mxu0 0.0
      %898 = vmatpush1.msra.mxu0 0.0
      %899 = vmatprep.subr.mxu0 0.0
      %900 = vmatpush1.msra.mxu0 0.0
      %901 = vmatprep.subr.mxu0 0.0
      %902 = vmatpush1.msra.mxu0 0.0
      %903 = vmatprep.subr.mxu0 0.0
      %904 = vmatpush1.msra.mxu0 0.0
      %905 = vmatprep.subr.mxu0 0.0
      %906 = vmatpush1.msra.mxu0 0.0
      %907 = vmatprep.subr.mxu0 0.0
      %908 = vmatpush1.msra.mxu0 0.0
      %909 = vmatprep.subr.mxu0 0.0
      %910 = vmatpush1.msra.mxu0 0.0
      %911 = vmatprep.subr.mxu0 0.0
      %912 = vmatpush1.msra.mxu0 0.0
      %913 = vmatprep.subr.mxu0 0.0
      %914 = vmatpush1.msra.mxu0 0.0
      %915 = vmatprep.subr.mxu0 0.0
      %916 = vmatpush1.msra.mxu0 0.0
      %917 = vmatprep.subr.mxu0 0.0
      %918 = vmatpush1.msra.mxu0 0.0
      %919 = vmatprep.subr.mxu0 0.0
      %920 = vmatpush1.msra.mxu0 0.0
      %921 = vmatprep.subr.mxu0 0.0
      %922 = vmatpush1.msra.mxu0 0.0
      %923 = vmatprep.subr.mxu0 0.0
      %924 = vmatpush1.msra.mxu0 0.0
      %925 = vmatprep.subr.mxu0 0.0
      %926 = vmatpush1.msra.mxu0 0.0
      %927 = vmatprep.mubr.f32.mxu0 0.0
      %928 = vmatmul.mubr.f32.gmra.mrb[0].mxu0 %v835
      %v929 = vpop.f32.mrb[0].mxu0
      %v930 = vadd.f32 %v861, %v929
      %v931 = vpop.f32.mrb[0].mxu0
      %932 = vdwg.mxu0
      %933 = vst [vmem:[#allocation12] sm:$0xff] %v930
    $region49: #{tpu_custom_call.1} parent=1 // pred_fallthru
      _
    // Predicated region
    $region50: #{tpu_custom_call.1} parent=1 // pred_check
      _
    $region51: #{tpu_custom_call.1} parent=1 // pred_check_branch
      %935 = sbr.rel (0) target = $region53
    $region52: #{tpu_custom_call.1} parent=1 // pred_region
      %s937 = ssub.s32 128, 128
      %938 = vsyncadd [#allocation6], %s937
      %s940 = sshll.u32 [#allocation12], 4
      %s941 = int_to_ptr.vmem [resolvable:$true] %s940
      %943 = dma.vmem_to_hbm [thread:$0]  %s941, 128, %s6, [#allocation6]
    $region53: #{tpu_custom_call.1} parent=1 // pred_fallthru
      _
    // Predicated region
    $region54: #{tpu_custom_call.1} parent=1 // pred_check
      _
    $region55: #{tpu_custom_call.1} parent=1 // pred_check_branch
      %945 = sbr.rel (0) target = $region57
    $region56: #{tpu_custom_call.1} parent=1 // pred_region
      %946 = dma.done [#allocation6], 128
    $region57: #{tpu_custom_call.1} parent=1 // pred_fallthru
      _
    %947 = vsyncpa [#allocation5], 1
    %948 = vsyncpa [#allocation8], 1
    %949 = vsyncpa [#allocation11], 1
    %950 = vsyncpa [#allocation6], 1

</llo_original>
